<compile_context>
chip_gen: v7x
topology: tpu7x:2x2x1
jax: 0.10.0
libtpu: 0.0.40
codegen_flags: <defaults>
</compile_context>

<pallas_src>
import functools

import jax
import jax.numpy as jnp
from jax.experimental import pallas as pl
from jax.experimental.pallas import tpu as pltpu


# ---------------------------------------------------------------------------
# Kernel
# ---------------------------------------------------------------------------
def _coupling_kernel(x_ref, w1_ref, b1_ref, w2_ref, b2_ref, y_ref, ld_ref=None,
                     *, reverse, compute_dtype):
    """One (batch-block, HW-tile) grid step.

    x_ref : (NB, 2, half, T)   both chunks, caller dtype
    w1_ref: (mid, half)        first 1x1-conv weight, compute dtype
    b1_ref: (mid, 1)           f32
    w2_ref: (2*half, mid) fused (s rows first) or (2, half, mid) split, compute dtype
    b2_ref: (2*half, 1) or (2, half, 1), f32; +2.0 already folded into the s rows
    y_ref : (NB, half, T)      transformed chunk only (chunk 0 passes through in HBM)
    ld_ref: (NB, 1, 128)       per-lane log-det partials, resident across HW tiles
    """
    nb = x_ref.shape[0]
    half = y_ref.shape[-2]
    fused = len(w2_ref.shape) == 2

    if not reverse:
        @pl.when(pl.program_id(1) == 0)
        def _init():
            ld_ref[...] = jnp.zeros_like(ld_ref)

    lane_parts = []
    for n in range(nb):                        # static unroll over batch rows in block
        xb = x_ref[n]                          # (2, half, T)
        z1 = xb[0]                             # == torch.chunk(x, 2, dim=1)[0]
        z2 = xb[1].astype(jnp.float32)

        # ---- nonlinearity(z1): 1x1-conv MLP, spatial axis on lanes -------------
        if half < 8:
            # K == half is tiny: the MXU would be almost entirely idle, so the
            # first layer is `half` broadcast VPU FMAs instead of an MXU push.
            w1f = w1_ref[...].astype(jnp.float32)
            z1f = z1.astype(jnp.float32)
            h1 = w1f[:, 0:1] * z1f[0:1, :]
            for i in range(1, half):
                h1 = h1 + w1f[:, i:i + 1] * z1f[i:i + 1, :]
            h1 = h1 + b1_ref[...]
        else:
            h1 = jnp.dot(w1_ref[...], z1.astype(compute_dtype),
                         preferred_element_type=jnp.float32) + b1_ref[...]
        h1 = jnp.maximum(h1, 0.0)              # ReLU
        h1c = h1.astype(compute_dtype)

        # ---- second layer; h[:, 0::2]/h[:, 1::2] folded into row-split weights --
        if fused:
            h2 = jnp.dot(w2_ref[...], h1c,
                         preferred_element_type=jnp.float32) + b2_ref[...]
            u = h2[:half]                      # s-branch logits (bias carries the +2)
            t = h2[half:]                      # t branch
        else:
            u = jnp.dot(w2_ref[0], h1c, preferred_element_type=jnp.float32) + b2_ref[0]
            t = jnp.dot(w2_ref[1], h1c, preferred_element_type=jnp.float32) + b2_ref[1]

        if reverse:
            # 1/sigmoid(u) == 1 + exp(-u): exact, one transcendental, no divide.
            # (Non-finite for u << 0 exactly like the reference z2 / sigmoid(u).)
            y_ref[n] = (z2 * (1.0 + jnp.exp(-u)) - t).astype(y_ref.dtype)
        else:
            # One shared exp feeds both the exact sigmoid and the log-sigmoid.
            e = jnp.exp(-jnp.abs(u))
            denom = 1.0 + e
            s = jnp.where(u >= 0.0, 1.0, e) / denom           # exact sigmoid(u)
            y_ref[n] = ((z2 + t) * s).astype(y_ref.dtype)

            log_s = jnp.minimum(u, 0.0) - jnp.log(denom)      # stable log(sigmoid(u))
            red = jnp.sum(log_s, axis=0, keepdims=True)       # (1, T) sublane reduce
            t_len = red.shape[-1]
            part = red[:, 0:128]
            for c in range(1, t_len // 128):                  # static lane-chunk adds
                part = part + red[:, c * 128:(c + 1) * 128]
            lane_parts.append(part)                           # (1, 128) per-lane part

    if not reverse:
        ld_ref[...] += jnp.stack(lane_parts, axis=0)          # (NB, 1, 128)


# ---------------------------------------------------------------------------
# VMEM-budget-aware tiling
# ---------------------------------------------------------------------------
def _vmem_capacity_bytes():
    try:
        return int(pltpu.get_tpu_info().vmem_capacity_bytes)
    except Exception:
        return 64 << 20            # conservative fallback (v7x per-TC physical VMEM)


def _vmem_usage_bytes(nb, t, half, mid, io_bytes, w_bytes):
    """Rough per-kernel VMEM footprint, including the f32 intermediates."""
    x_blk = 2 * nb * 2 * half * t * io_bytes           # double-buffered input block
    y_blk = 2 * nb * half * t * io_bytes                # double-buffered output block
    ld_blk = 2 * nb * 128 * 4                           # resident log-det block
    wts = 2 * (3 * half * mid * w_bytes + (mid + 2 * half) * 4)
    inter = nb * (mid * t * (4 + w_bytes)               # h1 (f32) + compute-dtype copy
                  + 6 * half * t * 4)                   # u, t, e, s, log_s, y temps
    return x_blk + y_blk + ld_blk + wts + int(1.25 * inter)


def _auto_tiles(batch, hw, half, mid, io_bytes, w_bytes, vmem_cap,
                target_block_bytes=4 << 20, max_tile=64 * 1024, max_nb=8):
    """Pick (T, NB): largest HW tile fitting the VMEM budget, then grow the batch
    block until each grid step moves >= target bytes (amortizes per-step cost)."""
    budget = vmem_cap // 2
    tiles = [t for t in range(128, min(hw, max_tile) + 1, 128) if hw % t == 0] or [hw]
    tile = tiles[0]
    for t in tiles:
        if _vmem_usage_bytes(1, t, half, mid, io_bytes, w_bytes) <= budget:
            tile = t
    nb = 1
    for n in range(2, min(batch, max_nb) + 1):
        if batch % n != 0:
            continue
        if nb * 3 * half * tile * io_bytes >= target_block_bytes:
            break
        if _vmem_usage_bytes(n, tile, half, mid, io_bytes, w_bytes) <= budget:
            nb = n
    return tile, nb


# ---------------------------------------------------------------------------
# Wrapper
# ---------------------------------------------------------------------------
def affine_coupling_forward(x_nchw, log_det_J, params, *, reverse=False,
                            tile_hw=None, batch_block=None,
                            compute_dtype=jnp.float32):
    """Pallas AffineCoupling.forward (NCHW in / NCHW out).

    compute_dtype: dtype of the MXU operands (weights and activations fed to the
    1x1-conv matmuls).  Use jnp.bfloat16 at production sizes; accumulation and
    all coupling/elementwise math stay f32 either way.
    """
    W1, b1, W2, b2 = params               # math layout: W1 (mid, C/2), W2 (C, mid)
    B, C, H, Wd = x_nchw.shape
    assert C % 2 == 0
    half = C // 2
    mid = W1.shape[0]
    HW = H * Wd
    # TODO(synk): H*W not a multiple of 128 needs wrapper-side lane padding plus an
    # in-kernel mask on the log-det sum; only the aligned case is implemented.
    assert HW % 128 == 0, "H*W must be a multiple of 128"

    # Free reshape only; keep the caller's dtype end-to-end (native-dtype I/O).
    x_view = x_nchw.reshape(B, 2, half, HW)
    io_bytes = x_view.dtype.itemsize
    w_bytes = 2 if compute_dtype == jnp.bfloat16 else 4

    # Kernel-layout parameters (tiny host-side constants; +2.0 folded into b2s).
    fuse_w2 = (half % 8 == 0)             # fused dot only if the row split is a free
                                          # f32 sublane slice
    w1 = W1.astype(compute_dtype)                                    # (mid, half)
    b1k = b1.reshape(mid, 1).astype(jnp.float32)
    if fuse_w2:
        w2 = jnp.concatenate([W2[0::2], W2[1::2]], 0).astype(compute_dtype)   # (C, mid)
        b2k = jnp.concatenate([b2[0::2] + 2.0, b2[1::2]], 0)
        b2k = b2k.reshape(2 * half, 1).astype(jnp.float32)
    else:
        w2 = jnp.stack([W2[0::2], W2[1::2]], 0).astype(compute_dtype)   # (2, half, mid)
        b2k = jnp.stack([b2[0::2] + 2.0, b2[1::2]], 0)
        b2k = b2k.reshape(2, half, 1).astype(jnp.float32)

    vmem_cap = _vmem_capacity_bytes()
    T, NB = _auto_tiles(B, HW, half, mid, io_bytes, w_bytes, vmem_cap)
    if tile_hw is not None:
        T = tile_hw
    if batch_block is not None:
        NB = batch_block
    assert HW % T == 0 and T % 128 == 0, "tile_hw must be a multiple of 128 dividing H*W"
    assert B % NB == 0, "batch_block must divide the batch"
    usage = _vmem_usage_bytes(NB, T, half, mid, io_bytes, w_bytes)
    vmem_limit = int(min(vmem_cap * 0.9, max(32 << 20, 2 * usage)))

    grid = (B // NB, HW // T)

    x_spec = pl.BlockSpec((NB, 2, half, T), lambda b, j: (b, 0, 0, j))
    # Aliased output: only the transformed chunk (index 1) is ever written.
    y_spec = pl.BlockSpec((NB, None, half, T), lambda b, j: (b, 1, 0, j))
    ld_spec = pl.BlockSpec((NB, 1, 128), lambda b, j: (b, 0, 0))

    def _resident(arr):                    # weights stay VMEM-resident across the grid
        nd = arr.ndim
        return pl.BlockSpec(arr.shape, lambda b, j, _nd=nd: (0,) * _nd)

    in_specs = [x_spec, _resident(w1), _resident(b1k), _resident(w2), _resident(b2k)]

    npix = B * HW
    cost = pl.CostEstimate(
        flops=npix * (2 * mid * half + 4 * half * mid + 12 * half),
        transcendentals=npix * half * (1 if reverse else 2),
        bytes_accessed=npix * half * 3 * io_bytes + 3 * half * mid * w_bytes,
    )
    cparams = pltpu.CompilerParams(
        dimension_semantics=("parallel", "arbitrary"),
        vmem_limit_bytes=vmem_limit,
    )

    kernel = functools.partial(_coupling_kernel, reverse=reverse,
                               compute_dtype=compute_dtype)
    args = (x_view, w1, b1k, w2, b2k)

    if reverse:
        y_out = pl.pallas_call(
            kernel,
            grid=grid,
            in_specs=in_specs,
            out_specs=y_spec,
            out_shape=jax.ShapeDtypeStruct((B, 2, half, HW), x_view.dtype),
            input_output_aliases={0: 0},
            compiler_params=cparams,
            cost_estimate=cost,
        )(*args)
        ld_out = log_det_J                  # log_det_J passes through unchanged
    else:
        y_out, ld_acc = pl.pallas_call(
            kernel,
            grid=grid,
            in_specs=in_specs,
            out_specs=(y_spec, ld_spec),
            out_shape=(jax.ShapeDtypeStruct((B, 2, half, HW), x_view.dtype),
                       jax.ShapeDtypeStruct((B, 1, 128), jnp.float32)),
            input_output_aliases={0: 0},
            compiler_params=cparams,
            cost_estimate=cost,
        )(*args)
        # Final 128 -> 1 lane reduce on the host over the tiny (B, 128) partials.
        ld_out = log_det_J.astype(jnp.float32) + jnp.sum(ld_acc[:, 0, :], axis=-1)

    return y_out.reshape(B, C, H, Wd), ld_out


# ---------------------------------------------------------------------------
# Pure-JAX reference (mirrors the PyTorch forward semantics)
# ---------------------------------------------------------------------------
def reference_forward(x_nchw, log_det_J, params, *, reverse=False,
                      compute_dtype=jnp.float32):
    W1, b1, W2, b2 = params
    B, C, H, Wd = x_nchw.shape
    half = C // 2
    xf = x_nchw.astype(jnp.float32)
    z1 = xf[:, :half].reshape(B, half, H * Wd)
    z2 = xf[:, half:].reshape(B, half, H * Wd)

    h1 = jnp.einsum('oi,bip->bop', W1.astype(compute_dtype), z1.astype(compute_dtype),
                    preferred_element_type=jnp.float32) + b1[None, :, None]
    h1 = jnp.maximum(h1, 0.0)
    h = jnp.einsum('oi,bip->bop', W2.astype(compute_dtype), h1.astype(compute_dtype),
                   preferred_element_type=jnp.float32) + b2[None, :, None]
    s = jax.nn.sigmoid(h[:, 0::2] + 2.0)
    t = h[:, 1::2]

    if reverse:
        yb = z2 / s - t
        ld = log_det_J
    else:
        yb = (z2 + t) * s
        ld = log_det_J + jnp.sum(jnp.log(s).reshape(B, -1), axis=1)
    y = jnp.concatenate([z1, yb], axis=1).reshape(B, C, H, Wd)
    return y, ld


def make_params(key, in_out_dim, mid_dim):
    """Deterministic synthetic parameters for the 1x1-conv MLP nonlinearity."""
    half = in_out_dim // 2
    k1, k2, k3, k4 = jax.random.split(key, 4)
    W1 = jax.random.normal(k1, (mid_dim, half), jnp.float32) * 0.2        # (mid, C/2)
    b1 = jax.random.normal(k2, (mid_dim,), jnp.float32) * 0.05
    W2 = jax.random.normal(k3, (in_out_dim, mid_dim), jnp.float32) * 0.2  # (C, mid)
    b2 = jax.random.normal(k4, (in_out_dim,), jnp.float32) * 0.05
    return (W1, b1, W2, b2)


if __name__ == "__main__":
    root = jax.random.PRNGKey(0)
    kx, kp, kx2, kp2 = jax.random.split(root, 4)

    # ---- Test 1: toy shapes (half=2), f32 compute, VPU first layer ------------
    B, C, H, W = 2, 4, 16, 16
    MID = 32
    x = jax.random.normal(kx, (B, C, H, W), jnp.float32)
    ld0 = jnp.zeros((B,), jnp.float32)
    params = make_params(kp, C, MID)

    # forced (2, 2) grid: exercises multi-tile log-det accumulation, NB=1
    y, ld = affine_coupling_forward(x, ld0, params, reverse=False,
                                    tile_hw=128, batch_block=1)
    jax.block_until_ready((y, ld))
    y_exp, ld_exp = reference_forward(x, ld0, params, reverse=False)
    assert y.shape == (B, C, H, W) and ld.shape == (B,)
    assert jnp.allclose(y, y_exp, rtol=1e-5, atol=1e-4)
    assert jnp.allclose(ld, ld_exp, rtol=1e-5, atol=1e-4)

    # auto tiling: picks T=256 and a batch block of 2 (single grid step)
    y2, ld2 = affine_coupling_forward(x, ld0, params, reverse=False)
    jax.block_until_ready((y2, ld2))
    assert jnp.allclose(y2, y_exp, rtol=1e-5, atol=1e-4)
    assert jnp.allclose(ld2, ld_exp, rtol=1e-5, atol=1e-4)

    # reverse (inference mode) + invertibility
    xr, ldr = affine_coupling_forward(y, ld, params, reverse=True,
                                      tile_hw=128, batch_block=1)
    jax.block_until_ready((xr, ldr))
    xr_exp, ldr_exp = reference_forward(y, ld, params, reverse=True)
    assert jnp.allclose(xr, xr_exp, rtol=1e-5, atol=1e-4)
    assert jnp.allclose(ldr, ldr_exp, rtol=1e-5, atol=1e-4)
    assert jnp.allclose(xr, x, rtol=1e-4, atol=1e-4)

    # ---- Test 2: larger channels -> fused W2 path + bf16 MXU operands ---------
    B2, C2, H2, W2d, MID2 = 2, 32, 16, 16, 64
    x2 = jax.random.normal(kx2, (B2, C2, H2, W2d), jnp.float32)
    ld0b = jnp.zeros((B2,), jnp.float32)
    params2 = make_params(kp2, C2, MID2)

    yb16, ldb16 = affine_coupling_forward(x2, ld0b, params2, reverse=False,
                                          compute_dtype=jnp.bfloat16)
    jax.block_until_ready((yb16, ldb16))
    y2_exp, ld2_exp = reference_forward(x2, ld0b, params2, reverse=False,
                                        compute_dtype=jnp.bfloat16)
    assert jnp.allclose(yb16, y2_exp, rtol=1e-4, atol=1e-4)
    assert jnp.allclose(ldb16, ld2_exp, rtol=1e-4, atol=5e-2)

    xrb, _ = affine_coupling_forward(yb16, ldb16, params2, reverse=True,
                                     compute_dtype=jnp.bfloat16)
    jax.block_until_ready(xrb)
    assert jnp.allclose(xrb, x2, rtol=1e-4, atol=1e-4)

    print("KERNEL_OK")
</pallas_src>

<mosaic_0001>
module attributes {stable_mosaic.version = 11 : i64} {
  func.func @_coupling_kernel(%arg0: i32, %arg1: i32, %arg2: memref<1x2x2x128xf32, #tpu.memory_space<vmem>>, %arg3: memref<32x2xf32, #tpu.memory_space<vmem>>, %arg4: memref<32x1xf32, #tpu.memory_space<vmem>>, %arg5: memref<2x2x32xf32, #tpu.memory_space<vmem>>, %arg6: memref<2x2x1xf32, #tpu.memory_space<vmem>>, %arg7: memref<1x1x2x128xf32, #tpu.memory_space<vmem>>, %arg8: memref<1x1x128xf32, #tpu.memory_space<vmem>>) attributes {dimension_semantics = [#tpu.dimension_semantics<parallel>, #tpu.dimension_semantics<arbitrary>], iteration_bounds = array<i64: 2, 2>, scalar_prefetch = 0 : i64, scratch_operands = 0 : i64, tpu.core_type = #tpu.core_type<tc>, window_params = [{transform_indices = @transform_0, window_bounds = array<i64: 1, 2, 2, 128>}, {pipeline_mode = #tpu.pipeline_mode<synchronous>, transform_indices = @transform_1, window_bounds = array<i64: 32, 2>}, {pipeline_mode = #tpu.pipeline_mode<synchronous>, transform_indices = @transform_2, window_bounds = array<i64: 32, 1>}, {pipeline_mode = #tpu.pipeline_mode<synchronous>, transform_indices = @transform_3, window_bounds = array<i64: 2, 2, 32>}, {pipeline_mode = #tpu.pipeline_mode<synchronous>, transform_indices = @transform_4, window_bounds = array<i64: 2, 2, 1>}, {transform_indices = @transform_5, window_bounds = array<i64: 1, 1, 2, 128>}, {transform_indices = @transform_6, window_bounds = array<i64: 1, 1, 128>}]} {
    %c0_i32 = arith.constant 0 : i32
    %0 = arith.cmpi eq, %arg1, %c0_i32 : i32
    %1 = arith.extui %0 : i1 to i32
    %c0_i32_0 = arith.constant 0 : i32
    %2 = arith.cmpi ne, %1, %c0_i32_0 : i32
    scf.if %2 {
      %cst_37 = arith.constant 0.000000e+00 : f32
      %66 = vector.broadcast %cst_37 : f32 to vector<1x1x128xf32>
      %c0_38 = arith.constant 0 : index
      %c0_39 = arith.constant 0 : index
      %c0_40 = arith.constant 0 : index
      %67 = vector.load %arg8[%c0_38, %c0_39, %c0_40] : memref<1x1x128xf32, #tpu.memory_space<vmem>>, vector<1x1x128xf32>
      tpu.vector_store %arg8[%c0_38, %c0_39, %c0_40], %66 {strides = array<i32>} : memref<1x1x128xf32, #tpu.memory_space<vmem>>, vector<1x1x128xf32>,
    } else {
    }
    %c0 = arith.constant 0 : index
    %c0_1 = arith.constant 0 : index
    %c0_2 = arith.constant 0 : index
    %c0_3 = arith.constant 0 : index
    %3 = vector.load %arg2[%c0, %c0_1, %c0_2, %c0_3] : memref<1x2x2x128xf32, #tpu.memory_space<vmem>>, vector<1x2x2x128xf32>
    %4 = vector.shape_cast %3 : vector<1x2x2x128xf32> to vector<2x2x128xf32>
    %5 = vector.extract_strided_slice %4 {offsets = [0, 0, 0], sizes = [1, 2, 128], strides = [1, 1, 1]} : vector<2x2x128xf32> to vector<1x2x128xf32>
    %6 = vector.shape_cast %5 : vector<1x2x128xf32> to vector<2x128xf32>
    %7 = vector.extract_strided_slice %4 {offsets = [1, 0, 0], sizes = [1, 2, 128], strides = [1, 1, 1]} : vector<2x2x128xf32> to vector<1x2x128xf32>
    %8 = vector.shape_cast %7 : vector<1x2x128xf32> to vector<2x128xf32>
    %c0_4 = arith.constant 0 : index
    %c0_5 = arith.constant 0 : index
    %9 = vector.load %arg3[%c0_4, %c0_5] : memref<32x2xf32, #tpu.memory_space<vmem>>, vector<32x2xf32>
    %10 = vector.extract_strided_slice %9 {offsets = [0, 0], sizes = [32, 1], strides = [1, 1]} : vector<32x2xf32> to vector<32x1xf32>
    %11 = vector.extract_strided_slice %6 {offsets = [0, 0], sizes = [1, 128], strides = [1, 1]} : vector<2x128xf32> to vector<1x128xf32>
    %12 = vector.broadcast %10 : vector<32x1xf32> to vector<32x128xf32>
    %13 = vector.broadcast %11 : vector<1x128xf32> to vector<32x128xf32>
    %14 = arith.mulf %12, %13 : vector<32x128xf32>
    %15 = vector.extract_strided_slice %9 {offsets = [0, 1], sizes = [32, 1], strides = [1, 1]} : vector<32x2xf32> to vector<32x1xf32>
    %16 = vector.extract_strided_slice %6 {offsets = [1, 0], sizes = [1, 128], strides = [1, 1]} : vector<2x128xf32> to vector<1x128xf32>
    %17 = vector.broadcast %15 : vector<32x1xf32> to vector<32x128xf32>
    %18 = vector.broadcast %16 : vector<1x128xf32> to vector<32x128xf32>
    %19 = arith.mulf %17, %18 : vector<32x128xf32>
    %20 = arith.addf %14, %19 : vector<32x128xf32>
    %c0_6 = arith.constant 0 : index
    %c0_7 = arith.constant 0 : index
    %21 = vector.load %arg4[%c0_6, %c0_7] : memref<32x1xf32, #tpu.memory_space<vmem>>, vector<32x1xf32>
    %22 = vector.broadcast %21 : vector<32x1xf32> to vector<32x128xf32>
    %23 = arith.addf %20, %22 : vector<32x128xf32>
    %cst = arith.constant 0.000000e+00 : f32
    %24 = vector.broadcast %cst : f32 to vector<32x128xf32>
    %25 = arith.maximumf %23, %24 : vector<32x128xf32>
    %c0_8 = arith.constant 0 : index
    %c0_9 = arith.constant 0 : index
    %c0_10 = arith.constant 0 : index
    %26 = vector.load %arg5[%c0_8, %c0_9, %c0_10] : memref<2x2x32xf32, #tpu.memory_space<vmem>>, vector<1x2x32xf32>
    %27 = vector.shape_cast %26 : vector<1x2x32xf32> to vector<2x32xf32>
    %cst_11 = arith.constant dense<0.000000e+00> : vector<2x128xf32>
    %28 = tpu.matmul %27, %25, %cst_11 {dimension_numbers = #tpu.dot_dimension_numbers<[1], [0], [0], [1], [0, 0, 1, 1], [], []>} : vector<2x32xf32>, vector<32x128xf32>, vector<2x128xf32> -> vector<2x128xf32>
    %c0_12 = arith.constant 0 : index
    %c0_13 = arith.constant 0 : index
    %c0_14 = arith.constant 0 : index
    %29 = vector.load %arg6[%c0_12, %c0_13, %c0_14] : memref<2x2x1xf32, #tpu.memory_space<vmem>>, vector<1x2x1xf32>
    %30 = vector.shape_cast %29 : vector<1x2x1xf32> to vector<2x1xf32>
    %31 = vector.broadcast %30 : vector<2x1xf32> to vector<2x128xf32>
    %32 = arith.addf %28, %31 : vector<2x128xf32>
    %c1 = arith.constant 1 : index
    %c0_15 = arith.constant 0 : index
    %c0_16 = arith.constant 0 : index
    %33 = vector.load %arg5[%c1, %c0_15, %c0_16] : memref<2x2x32xf32, #tpu.memory_space<vmem>>, vector<1x2x32xf32>
    %34 = vector.shape_cast %33 : vector<1x2x32xf32> to vector<2x32xf32>
    %cst_17 = arith.constant dense<0.000000e+00> : vector<2x128xf32>
    %35 = tpu.matmul %34, %25, %cst_17 {dimension_numbers = #tpu.dot_dimension_numbers<[1], [0], [0], [1], [0, 0, 1, 1], [], []>} : vector<2x32xf32>, vector<32x128xf32>, vector<2x128xf32> -> vector<2x128xf32>
    %c1_18 = arith.constant 1 : index
    %c0_19 = arith.constant 0 : index
    %c0_20 = arith.constant 0 : index
    %36 = vector.load %arg6[%c1_18, %c0_19, %c0_20] : memref<2x2x1xf32, #tpu.memory_space<vmem>>, vector<1x2x1xf32>
    %37 = vector.shape_cast %36 : vector<1x2x1xf32> to vector<2x1xf32>
    %38 = vector.broadcast %37 : vector<2x1xf32> to vector<2x128xf32>
    %39 = arith.addf %35, %38 : vector<2x128xf32>
    %40 = math.absf %32 : vector<2x128xf32>
    %cst_21 = arith.constant 0.000000e+00 : f32
    %41 = vector.broadcast %cst_21 : f32 to vector<2x128xf32>
    %42 = arith.subf %41, %40 : vector<2x128xf32>
    %43 = math.exp %42 : vector<2x128xf32>
    %cst_22 = arith.constant 1.000000e+00 : f32
    %44 = vector.broadcast %cst_22 : f32 to vector<2x128xf32>
    %45 = arith.addf %44, %43 : vector<2x128xf32>
    %cst_23 = arith.constant 0.000000e+00 : f32
    %46 = vector.broadcast %cst_23 : f32 to vector<2x128xf32>
    %47 = arith.cmpf oge, %32, %46 : vector<2x128xf32>
    %cst_24 = arith.constant 1.000000e+00 : f32
    %48 = vector.broadcast %cst_24 : f32 to vector<2x128xf32>
    %49 = arith.select %47, %48, %43 : vector<2x128xi1>, vector<2x128xf32>
    %50 = arith.divf %49, %45 : vector<2x128xf32>
    %51 = arith.addf %8, %39 : vector<2x128xf32>
    %52 = arith.mulf %51, %50 : vector<2x128xf32>
    %c0_25 = arith.constant 0 : index
    %c0_26 = arith.constant 0 : index
    %c0_27 = arith.constant 0 : index
    %c0_28 = arith.constant 0 : index
    %53 = vector.load %arg7[%c0_25, %c0_26, %c0_27, %c0_28] : memref<1x1x2x128xf32, #tpu.memory_space<vmem>>, vector<1x1x2x128xf32>
    %54 = vector.shape_cast %53 : vector<1x1x2x128xf32> to vector<2x128xf32>
    %55 = vector.shape_cast %52 : vector<2x128xf32> to vector<1x1x2x128xf32>
    tpu.vector_store %arg7[%c0_25, %c0_26, %c0_27, %c0_28], %55 {strides = array<i32>} : memref<1x1x2x128xf32, #tpu.memory_space<vmem>>, vector<1x1x2x128xf32>,
    %cst_29 = arith.constant 0.000000e+00 : f32
    %56 = vector.broadcast %cst_29 : f32 to vector<2x128xf32>
    %57 = arith.minimumf %32, %56 : vector<2x128xf32>
    %58 = math.log %45 : vector<2x128xf32>
    %59 = arith.subf %57, %58 : vector<2x128xf32>
    %cst_30 = arith.constant dense<0.000000e+00> : vector<128xf32>
    %60 = vector.multi_reduction <add>, %59, %cst_30 [0] : vector<2x128xf32> to vector<128xf32>
    %61 = vector.shape_cast %60 : vector<128xf32> to vector<1x128xf32>
    %c0_31 = arith.constant 0 : index
    %c0_32 = arith.constant 0 : index
    %c0_33 = arith.constant 0 : index
    %62 = vector.load %arg8[%c0_31, %c0_32, %c0_33] : memref<1x1x128xf32, #tpu.memory_space<vmem>>, vector<1x1x128xf32>
    %63 = vector.shape_cast %61 : vector<1x128xf32> to vector<1x1x128xf32>
    %64 = arith.addf %62, %63 : vector<1x1x128xf32>
    %c0_34 = arith.constant 0 : index
    %c0_35 = arith.constant 0 : index
    %c0_36 = arith.constant 0 : index
    %65 = vector.load %arg8[%c0_34, %c0_35, %c0_36] : memref<1x1x128xf32, #tpu.memory_space<vmem>>, vector<1x1x128xf32>
    tpu.vector_store %arg8[%c0_34, %c0_35, %c0_36], %64 {strides = array<i32>} : memref<1x1x128xf32, #tpu.memory_space<vmem>>, vector<1x1x128xf32>,
    return
  }
  func.func @transform_0(%arg0: i32, %arg1: i32) -> (i32, i32, i32, i32) {
    %c0_i32 = arith.constant 0 : i32
    %c0_i32_0 = arith.constant 0 : i32
    %c0_i32_1 = arith.constant 0 : i32
    return %arg0, %c0_i32, %c0_i32_0, %arg1 : i32, i32, i32, i32
  }
  func.func @transform_1(%arg0: i32, %arg1: i32) -> (i32, i32) {
    %c0_i32 = arith.constant 0 : i32
    %c0_i32_0 = arith.constant 0 : i32
    %c0_i32_1 = arith.constant 0 : i32
    return %c0_i32, %c0_i32_0 : i32, i32
  }
  func.func @transform_2(%arg0: i32, %arg1: i32) -> (i32, i32) {
    %c0_i32 = arith.constant 0 : i32
    %c0_i32_0 = arith.constant 0 : i32
    %c0_i32_1 = arith.constant 0 : i32
    return %c0_i32, %c0_i32_0 : i32, i32
  }
  func.func @transform_3(%arg0: i32, %arg1: i32) -> (i32, i32, i32) {
    %c0_i32 = arith.constant 0 : i32
    %c0_i32_0 = arith.constant 0 : i32
    %c0_i32_1 = arith.constant 0 : i32
    %c0_i32_2 = arith.constant 0 : i32
    return %c0_i32, %c0_i32_0, %c0_i32_1 : i32, i32, i32
  }
  func.func @transform_4(%arg0: i32, %arg1: i32) -> (i32, i32, i32) {
    %c0_i32 = arith.constant 0 : i32
    %c0_i32_0 = arith.constant 0 : i32
    %c0_i32_1 = arith.constant 0 : i32
    %c0_i32_2 = arith.constant 0 : i32
    return %c0_i32, %c0_i32_0, %c0_i32_1 : i32, i32, i32
  }
  func.func @transform_5(%arg0: i32, %arg1: i32) -> (i32, i32, i32, i32) {
    %c1_i32 = arith.constant 1 : i32
    %c0_i32 = arith.constant 0 : i32
    %c0_i32_0 = arith.constant 0 : i32
    return %arg0, %c1_i32, %c0_i32, %arg1 : i32, i32, i32, i32
  }
  func.func @transform_6(%arg0: i32, %arg1: i32) -> (i32, i32, i32) {
    %c0_i32 = arith.constant 0 : i32
    %c0_i32_0 = arith.constant 0 : i32
    %c0_i32_1 = arith.constant 0 : i32
    return %arg0, %c0_i32, %c0_i32_0 : i32, i32, i32
  }
}

</mosaic_0001>

<llo_original>
// kernel: tpu_custom_call.1
$region0: #{tpu_custom_call.1}
  #allocation0 [shape = 'u32[]', space=smem, size = 0x4, offset = 0x4, fixed_abs, tag = 'smem constant byte address 0x4 - core index']
  #allocation1 [shape = 'u32[144,128]{1,0:T(1,128)}', space=vmem, size = 0x12000, scoped, tag = 'internal scratch']
  %s0 = inlined_call_operand.hbm [shape: f32[2,2,2,256], index: 0, kind: input, shape index: {}, may-alias: {0,5}]
  %s1 = inlined_call_operand.vmem [shape: f32[32,2], index: 1, kind: input, shape index: {}]
  %s2 = inlined_call_operand.vmem [shape: f32[32,1], index: 2, kind: input, shape index: {}]
  %s3 = inlined_call_operand.vmem [shape: f32[2,2,32], index: 3, kind: input, shape index: {}]
  %s4 = inlined_call_operand.vmem [shape: f32[2,2,1], index: 4, kind: input, shape index: {}]
  %s5 = inlined_call_operand.hbm [shape: f32[2,2,2,256], index: 5, kind: output, shape index: {0}, may-alias: {0,5}]
  %s6 = inlined_call_operand.hbm [shape: f32[2,1,128], index: 6, kind: output, shape index: {1}]
  %7 = xla_tuple %s5, %s6
  %s8 = sld [smem:[#allocation0]]
  $region69: #{tpu_custom_call.1} parent=0
    _
  %s10 = ssub.s32 1, %s8
  %s11 = scalar_select 0, %s10, %s8
  $region1: #{tpu_custom_call.1} parent=0
    #allocation2 [shape = 'u8[4096]{0}', space=vmem, size = 0x1000, scoped, tag = 'input window, operand 0']
    #allocation3 [shape = 's32[2]{0}', space=sflag, size = 0x8, scoped, tag = 'scoped memory for tpu_custom_call.1']
    #allocation4 [shape = 's32[2]{0}', space=sflag, size = 0x8, scoped, tag = 'scoped memory for tpu_custom_call.1']
    #allocation5 [shape = 'u8[2048]{0}', space=vmem, size = 0x800, scoped, tag = 'output window, operand 0']
    #allocation6 [shape = 'u8[1024]{0}', space=vmem, size = 0x400, scoped, tag = 'output window, operand 1']
    #allocation7 [shape = 's32[2]{0}', space=sflag, size = 0x8, scoped, tag = 'scoped memory for tpu_custom_call.1']
    %12 = vsyncpa [#allocation3], 0
    %s13 = scalar_lea.sflag [#allocation3], 1
    %14 = vsyncpa %s13, 0
    %15 = vsyncpa [#allocation4], 0
    %s16 = scalar_lea.sflag [#allocation4], 1
    %17 = vsyncpa %s16, 0
    %18 = vsyncpa [#allocation7], 0
    %s19 = scalar_lea.sflag [#allocation7], 1
    %20 = vsyncpa %s19, 0
    loop: start=0, step=1, limit=6
    $region2: #{tpu_custom_call.1} parent=1 // loop_pre_header
      _
    $region3: #{tpu_custom_call.1} parent=1 // loop_header
      %s22 = sphi 0, %s26
      %p23 = scmp.ge.s32.totalorder %s22, 6
      %s29 = sphi 0, %s41
      %s30 = sphi 0, %s37
      %s31 = sphi 0, %s29
      %s32 = sphi 0, %s30
      %s33 = sphi 0, %s31
      %s34 = sphi 0, %s32
      %s46 = sphi 0, %s48
      %s49 = sphi 0, %s46
      %s50 = sphi 0, %s49
      %s66 = sphi 0, %s50
      %s70 = sphi 0, %s70
      %s72 = sphi 0, %s70
      %s73 = sphi 0, %s72
      %s87 = sphi 0, %s73
      %s91 = sphi 0, %s91
      %s93 = sphi 0, %s91
      %s94 = sphi 0, %s93
      %s108 = sphi 0, %s94
      %s112 = sphi 0, %s112
      %s114 = sphi 0, %s112
      %s115 = sphi 0, %s114
      %s129 = sphi 0, %s115
      %s133 = sphi 0, %s133
      %s135 = sphi 0, %s133
      %s136 = sphi 0, %s135
      %s150 = sphi 0, %s136
      %s158 = sphi 0, %s160
      %s161 = sphi 0, %s158
      %s162 = sphi 0, %s161
      %s178 = sphi 0, %s162
      %s184 = sphi 0, %s186
      %s187 = sphi 0, %s184
      %s188 = sphi 0, %s187
      %s204 = sphi 0, %s188
    $region4: #{tpu_custom_call.1} parent=1 // loop_header_branch
      %25 = sbr.rel (%p23) target = $region8
    $region5: #{tpu_custom_call.1} parent=1 // loop_body
      %s27 = ssub.s32 %s22, 1
      %s28 = ssub.s32 %s22, 2
      %s35 = sadd.s32 1, %s30
      %p36 = scmp.ge.s32.totalorder %s35, 2
      %s37 = scalar_select %p36, 0, %s35
      %s38 = sadd.s32 1, %s29
      %s39 = scalar_select %p36, %s38, %s29
      %p40 = scmp.ge.s32.totalorder %s39, 2
      %s41 = scalar_select %p40, 0, %s39
      %s42 = ssub.s32 %s29, %s41
      %s43 = ssub.s32 %s30, %s37
      %s44 = sor.u32 %s42, %s43
      %p45 = scmp.eq.s32.totalorder %s44, 0
      %s47 = sadd.s32 %s46, 1
      %s48 = scalar_select %p45, %s46, %s47
      %p51 = pneg %p45
      %p52 = scmp.eq.s32.totalorder %s22, 3
      %p53 = por %p51, %p52
      %p54 = scmp.ne.s32.totalorder %s46, %s49
      %p55 = scmp.eq.s32.totalorder %s22, 0
      %p56 = por %p54, %p55
      %p57 = scmp.ne.s32.totalorder %s46, %s49
      %p58 = scmp.eq.s32.totalorder %s27, 3
      %p59 = por %p57, %p58
      %p60 = scmp.ne.s32.totalorder %s49, %s50
      %p61 = scmp.eq.s32.totalorder %s27, 0
      %p62 = por %p60, %p61
      %p63 = scmp.ne.s32.totalorder %s49, %s50
      %p64 = scmp.eq.s32.totalorder %s28, 3
      %p65 = por %p63, %p64
      %p67 = scmp.ne.s32.totalorder %s50, %s66
      %p68 = scmp.eq.s32.totalorder %s28, 0
      %p69 = por %p67, %p68
      %s71 = sadd.s32 %s70, 1
      %p74 = scmp.eq.s32.totalorder %s22, 3
      %p75 = scmp.ne.s32.totalorder %s70, %s72
      %p76 = scmp.eq.s32.totalorder %s22, 0
      %p77 = por %p75, %p76
      %p78 = scmp.ne.s32.totalorder %s70, %s72
      %p79 = scmp.eq.s32.totalorder %s27, 3
      %p80 = por %p78, %p79
      %p81 = scmp.ne.s32.totalorder %s72, %s73
      %p82 = scmp.eq.s32.totalorder %s27, 0
      %p83 = por %p81, %p82
      %p84 = scmp.ne.s32.totalorder %s72, %s73
      %p85 = scmp.eq.s32.totalorder %s28, 3
      %p86 = por %p84, %p85
      %p88 = scmp.ne.s32.totalorder %s73, %s87
      %p89 = scmp.eq.s32.totalorder %s28, 0
      %p90 = por %p88, %p89
      %s92 = sadd.s32 %s91, 1
      %p95 = scmp.eq.s32.totalorder %s22, 3
      %p96 = scmp.ne.s32.totalorder %s91, %s93
      %p97 = scmp.eq.s32.totalorder %s22, 0
      %p98 = por %p96, %p97
      %p99 = scmp.ne.s32.totalorder %s91, %s93
      %p100 = scmp.eq.s32.totalorder %s27, 3
      %p101 = por %p99, %p100
      %p102 = scmp.ne.s32.totalorder %s93, %s94
      %p103 = scmp.eq.s32.totalorder %s27, 0
      %p104 = por %p102, %p103
      %p105 = scmp.ne.s32.totalorder %s93, %s94
      %p106 = scmp.eq.s32.totalorder %s28, 3
      %p107 = por %p105, %p106
      %p109 = scmp.ne.s32.totalorder %s94, %s108
      %p110 = scmp.eq.s32.totalorder %s28, 0
      %p111 = por %p109, %p110
      %s113 = sadd.s32 %s112, 1
      %p116 = scmp.eq.s32.totalorder %s22, 3
      %p117 = scmp.ne.s32.totalorder %s112, %s114
      %p118 = scmp.eq.s32.totalorder %s22, 0
      %p119 = por %p117, %p118
      %p120 = scmp.ne.s32.totalorder %s112, %s114
      %p121 = scmp.eq.s32.totalorder %s27, 3
      %p122 = por %p120, %p121
      %p123 = scmp.ne.s32.totalorder %s114, %s115
      %p124 = scmp.eq.s32.totalorder %s27, 0
      %p125 = por %p123, %p124
      %p126 = scmp.ne.s32.totalorder %s114, %s115
      %p127 = scmp.eq.s32.totalorder %s28, 3
      %p128 = por %p126, %p127
      %p130 = scmp.ne.s32.totalorder %s115, %s129
      %p131 = scmp.eq.s32.totalorder %s28, 0
      %p132 = por %p130, %p131
      %s134 = sadd.s32 %s133, 1
      %p137 = scmp.eq.s32.totalorder %s22, 3
      %p138 = scmp.ne.s32.totalorder %s133, %s135
      %p139 = scmp.eq.s32.totalorder %s22, 0
      %p140 = por %p138, %p139
      %p141 = scmp.ne.s32.totalorder %s133, %s135
      %p142 = scmp.eq.s32.totalorder %s27, 3
      %p143 = por %p141, %p142
      %p144 = scmp.ne.s32.totalorder %s135, %s136
      %p145 = scmp.eq.s32.totalorder %s27, 0
      %p146 = por %p144, %p145
      %p147 = scmp.ne.s32.totalorder %s135, %s136
      %p148 = scmp.eq.s32.totalorder %s28, 3
      %p149 = por %p147, %p148
      %p151 = scmp.ne.s32.totalorder %s136, %s150
      %p152 = scmp.eq.s32.totalorder %s28, 0
      %p153 = por %p151, %p152
      %s154 = ssub.s32 %s29, %s41
      %s155 = ssub.s32 %s30, %s37
      %s156 = sor.u32 %s154, %s155
      %p157 = scmp.eq.s32.totalorder %s156, 0
      %s159 = sadd.s32 %s158, 1
      %s160 = scalar_select %p157, %s158, %s159
      %p163 = pneg %p157
      %p164 = scmp.eq.s32.totalorder %s22, 3
      %p165 = por %p163, %p164
      %p166 = scmp.ne.s32.totalorder %s158, %s161
      %p167 = scmp.eq.s32.totalorder %s22, 0
      %p168 = por %p166, %p167
      %p169 = scmp.ne.s32.totalorder %s158, %s161
      %p170 = scmp.eq.s32.totalorder %s27, 3
      %p171 = por %p169, %p170
      %p172 = scmp.ne.s32.totalorder %s161, %s162
      %p173 = scmp.eq.s32.totalorder %s27, 0
      %p174 = por %p172, %p173
      %p175 = scmp.ne.s32.totalorder %s161, %s162
      %p176 = scmp.eq.s32.totalorder %s28, 3
      %p177 = por %p175, %p176
      %p179 = scmp.ne.s32.totalorder %s162, %s178
      %p180 = scmp.eq.s32.totalorder %s28, 0
      %p181 = por %p179, %p180
      %s182 = ssub.s32 %s29, %s41
      %p183 = scmp.eq.s32.totalorder %s182, 0
      %s185 = sadd.s32 %s184, 1
      %s186 = scalar_select %p183, %s184, %s185
      %p189 = pneg %p183
      %p190 = scmp.eq.s32.totalorder %s22, 3
      %p191 = por %p189, %p190
      %p192 = scmp.ne.s32.totalorder %s184, %s187
      %p193 = scmp.eq.s32.totalorder %s22, 0
      %p194 = por %p192, %p193
      %p195 = scmp.ne.s32.totalorder %s184, %s187
      %p196 = scmp.eq.s32.totalorder %s27, 3
      %p197 = por %p195, %p196
      %p198 = scmp.ne.s32.totalorder %s187, %s188
      %p199 = scmp.eq.s32.totalorder %s27, 0
      %p200 = por %p198, %p199
      %p201 = scmp.ne.s32.totalorder %s187, %s188
      %p202 = scmp.eq.s32.totalorder %s28, 3
      %p203 = por %p201, %p202
      %p205 = scmp.ne.s32.totalorder %s188, %s204
      %p206 = scmp.eq.s32.totalorder %s28, 0
      %p207 = por %p205, %p206
      %p208 = scmp.le.s32.totalorder 1, %s22
      %p209 = scmp.lt.s32.totalorder %s22, 5
      %p210 = pnand %p208, %p209
      %p211 = pneg %p210
      // Predicated region
      $region9: #{tpu_custom_call.1} parent=5 // pred_check
        _
      $region10: #{tpu_custom_call.1} parent=5 // pred_check_branch
        %213 = sbr.rel (%p210) target = $region12
      $region11: #{tpu_custom_call.1} parent=5 // pred_region
        %s214 = ssub.s32 %s22, 1
        // Predicated region
        $region13: #{tpu_custom_call.1} parent=11 // pred_check
          %p215 = pneg %p83
        $region14: #{tpu_custom_call.1} parent=11 // pred_check_branch
          %217 = sbr.rel (%p215) target = $region16
        $region15: #{tpu_custom_call.1} parent=11 // pred_region
          _
        $region16: #{tpu_custom_call.1} parent=11 // pred_fallthru
          _
        // Predicated region
        $region17: #{tpu_custom_call.1} parent=11 // pred_check
          %p218 = pneg %p104
        $region18: #{tpu_custom_call.1} parent=11 // pred_check_branch
          %220 = sbr.rel (%p218) target = $region20
        $region19: #{tpu_custom_call.1} parent=11 // pred_region
          _
        $region20: #{tpu_custom_call.1} parent=11 // pred_fallthru
          _
        // Predicated region
        $region21: #{tpu_custom_call.1} parent=11 // pred_check
          %p221 = pneg %p125
        $region22: #{tpu_custom_call.1} parent=11 // pred_check_branch
          %223 = sbr.rel (%p221) target = $region24
        $region23: #{tpu_custom_call.1} parent=11 // pred_region
          _
        $region24: #{tpu_custom_call.1} parent=11 // pred_fallthru
          _
        // Predicated region
        $region25: #{tpu_custom_call.1} parent=11 // pred_check
          %p224 = pneg %p146
        $region26: #{tpu_custom_call.1} parent=11 // pred_check_branch
          %226 = sbr.rel (%p224) target = $region28
        $region27: #{tpu_custom_call.1} parent=11 // pred_region
          _
        $region28: #{tpu_custom_call.1} parent=11 // pred_fallthru
          _
      $region12: #{tpu_custom_call.1} parent=5 // pred_fallthru
        _
      %p227 = scmp.lt.s32.totalorder %s22, 4
      // Predicated region
      $region29: #{tpu_custom_call.1} parent=5 // pred_check
        %p228 = pneg %p227
      $region30: #{tpu_custom_call.1} parent=5 // pred_check_branch
        %230 = sbr.rel (%p228) target = $region32
      $region31: #{tpu_custom_call.1} parent=5 // pred_region
        // Predicated region
        $region33: #{tpu_custom_call.1} parent=31 // pred_check
          %p231 = pneg %p56
        $region34: #{tpu_custom_call.1} parent=31 // pred_check_branch
          %233 = sbr.rel (%p231) target = $region36
        $region35: #{tpu_custom_call.1} parent=31 // pred_region
          %s234 = sand.u32 %s46, 1
          %s235 = scalar_lea.sflag [#allocation3], %s234
          %s236 = sand.u32 %s46, 1
          %s237 = smul.addr %s236, 4
          %s238 = scalar_lea.vmem [#allocation2], %s237
          %s240 = ssub.s32 64, 64
          %241 = vsyncadd %s235, %s240
          %s242 = smul.addr %s29, 4
          %s243 = sadd.s32 %s30, %s242
          %s244 = smul.addr %s243, 32
          %s245 = scalar_lea.hbm %s0, %s244
          %s246 = sshll.u32 %s238, 4
          %s247 = int_to_ptr.vmem [resolvable:$true] %s246
          %252 = dma.hbm_to_vmem [thread:$0]  %s245, 64, %s247, %s235, 64, 32, 2
        $region36: #{tpu_custom_call.1} parent=31 // pred_fallthru
          _
      $region32: #{tpu_custom_call.1} parent=5 // pred_fallthru
        _
      %p253 = scmp.le.s32.totalorder 1, %s22
      %p254 = scmp.lt.s32.totalorder %s22, 5
      %p255 = pnand %p253, %p254
      %p256 = pneg %p255
      // Predicated region
      $region37: #{tpu_custom_call.1} parent=5 // pred_check
        _
      $region38: #{tpu_custom_call.1} parent=5 // pred_check_branch
        %258 = sbr.rel (%p255) target = $region40
      $region39: #{tpu_custom_call.1} parent=5 // pred_region
        %s259 = ssub.s32 %s22, 1
        %s260 = sand.u32 %s49, 1
        %s261 = scalar_lea.sflag [#allocation3], %s260
        %s262 = sand.u32 %s49, 1
        %s263 = smul.addr %s262, 4
        %s264 = scalar_lea.vmem [#allocation2], %s263
        // Predicated region
        $region41: #{tpu_custom_call.1} parent=39 // pred_check
          %p265 = pneg %p62
        $region42: #{tpu_custom_call.1} parent=39 // pred_check_branch
          %267 = sbr.rel (%p265) target = $region44
        $region43: #{tpu_custom_call.1} parent=39 // pred_region
          %268 = dma.done %s261, 64
        $region44: #{tpu_custom_call.1} parent=39 // pred_fallthru
          _
        %s269 = sand.u32 %s49, 1
        %s270 = scalar_lea.sflag [#allocation3], %s269
        %s271 = sand.u32 %s49, 1
        %s272 = smul.addr %s271, 4
        %s273 = scalar_lea.vmem [#allocation2], %s272
        %p274 = pneg %p62
        %p275 = pneg %p59
        %p276 = pneg %p83
        %p277 = pneg %p80
        %p278 = pneg %p104
        %p279 = pneg %p101
        %p280 = pneg %p125
        %p281 = pneg %p122
        %p282 = pneg %p146
        %p283 = pneg %p143
        %p284 = pneg %p174
        %p285 = pneg %p171
        %s286 = sand.u32 %s161, 1
        %s287 = scalar_lea.sflag [#allocation4], %s286
        %s288 = sand.u32 %s161, 1
        %s289 = smul.addr %s288, 2
        %s290 = scalar_lea.vmem [#allocation5], %s289
        %p291 = pneg %p200
        %p292 = pneg %p197
        %s293 = sand.u32 %s187, 1
        %s294 = scalar_lea.sflag [#allocation7], %s293
        %s295 = sand.u32 %s187, 1
        %s296 = scalar_lea.vmem [#allocation6], %s295
        %p297 = scmp.eq.s32.totalorder %s32, 0
        // Predicated region
        $region45: #{tpu_custom_call.1} parent=39 // pred_check
          %p298 = pneg %p297
        $region46: #{tpu_custom_call.1} parent=39 // pred_check_branch
          %300 = sbr.rel (%p298) target = $region48
        $region47: #{tpu_custom_call.1} parent=39 // pred_region
          %301 = vst [vmem:[%s296] sm:$0x1] 0.0
        $region48: #{tpu_custom_call.1} parent=39 // pred_fallthru
          _
        %v302 = vld [vmem:[%s264] sm:$0x3]
        %v303 = vld [vmem:[%s264 + $0x2] sm:$0x3]
        %v304 = vld [vmem:[%s1] sm:$0xff]
        %v305 = vld [vmem:[%s1 + $0x8] sm:$0xff]
        %v306 = vld [vmem:[%s1 + $0x10] sm:$0xff]
        %v307 = vld [vmem:[%s1 + $0x18] sm:$0xff]
        %309 = vset.pattern.permute.xlu0 0
        %310 = vperm.xlu0 %309, %v304
        %v311 = vpop.permute.xlu0 %310
        %314 = vset.pattern.permute.xlu0 0
        %315 = vperm.xlu0 %314, %v305
        %v316 = vpop.permute.xlu0 %315
        %319 = vset.pattern.permute.xlu0 0
        %320 = vperm.xlu0 %319, %v306
        %v321 = vpop.permute.xlu0 %320
        %324 = vset.pattern.permute.xlu0 0
        %325 = vperm.xlu0 %324, %v307
        %v326 = vpop.permute.xlu0 %325
        %v328 = vlaneseq
        %v329 = vshrl.u32 %v328, 7
        %v330 = vsub.s32 0, %v329
        %v331 = vrot.slane %v302, %v330
        %v332 = vmul.f32 %v311, %v331
        %v333 = vmul.f32 %v316, %v331
        %v334 = vmul.f32 %v321, %v331
        %v335 = vmul.f32 %v326, %v331
        %336 = vset.pattern.permute.xlu0 1
        %337 = vperm.xlu0 %336, %v304
        %v338 = vpop.permute.xlu0 %337
        %340 = vset.pattern.permute.xlu0 1
        %341 = vperm.xlu0 %340, %v305
        %v342 = vpop.permute.xlu0 %341
        %344 = vset.pattern.permute.xlu0 1
        %345 = vperm.xlu0 %344, %v306
        %v346 = vpop.permute.xlu0 %345
        %348 = vset.pattern.permute.xlu0 1
        %349 = vperm.xlu0 %348, %v307
        %v350 = vpop.permute.xlu0 %349
        %v352 = vlaneseq
        %v353 = vshrl.u32 %v352, 7
        %v354 = vsub.s32 1, %v353
        %v355 = vrot.slane %v302, %v354
        %v356 = vmul.f32 %v338, %v355
        %v357 = vmul.f32 %v342, %v355
        %v358 = vmul.f32 %v346, %v355
        %v359 = vmul.f32 %v350, %v355
        %v360 = vadd.f32 %v332, %v356
        %v361 = vadd.f32 %v333, %v357
        %v362 = vadd.f32 %v334, %v358
        %v363 = vadd.f32 %v335, %v359
        %v364 = vld [vmem:[%s2] sm:$0xff]
        %v365 = vld [vmem:[%s2 + $0x8] sm:$0xff]
        %v366 = vld [vmem:[%s2 + $0x10] sm:$0xff]
        %v367 = vld [vmem:[%s2 + $0x18] sm:$0xff]
        %369 = vset.pattern.permute.xlu0 0
        %370 = vperm.xlu0 %369, %v364
        %v371 = vpop.permute.xlu0 %370
        %374 = vset.pattern.permute.xlu0 0
        %375 = vperm.xlu0 %374, %v365
        %v376 = vpop.permute.xlu0 %375
        %379 = vset.pattern.permute.xlu0 0
        %380 = vperm.xlu0 %379, %v366
        %v381 = vpop.permute.xlu0 %380
        %384 = vset.pattern.permute.xlu0 0
        %385 = vperm.xlu0 %384, %v367
        %v386 = vpop.permute.xlu0 %385
        %v388 = vadd.f32 %v360, %v371
        %v389 = vadd.f32 %v361, %v376
        %v390 = vadd.f32 %v362, %v381
        %v391 = vadd.f32 %v363, %v386
        %v392 = vmax.f32 %v388, 0.0
        %v393 = vmax.f32 %v389, 0.0
        %v394 = vmax.f32 %v390, 0.0
        %v395 = vmax.f32 %v391, 0.0
        %v396 = vld [vmem:[%s3] sm:$0x3]
        %v397 = vld [vmem:[%s4] sm:$0x3]
        %399 = vset.pattern.permute.xlu0 0
        %400 = vperm.xlu0 %399, %v397
        %v401 = vpop.permute.xlu0 %400
        %vm403 = vcmask 261120
        %v405 = vsel %vm403, %v396, 0
        %407 = vmatprep.subr.mxu0 0.0
        %408 = vmatpush1.msra.mxu0 %v392
        %409 = vmatprep.subr.mxu0 0.0
        %410 = vmatpush1.msra.mxu0 %v393
        %411 = vmatprep.subr.mxu0 0.0
        %412 = vmatpush1.msra.mxu0 %v394
        %413 = vmatprep.subr.mxu0 0.0
        %414 = vmatpush1.msra.mxu0 %v395
        %415 = vmatprep.subr.mxu0 0.0
        %416 = vmatpush1.msra.mxu0 0.0
        %417 = vmatprep.subr.mxu0 0.0
        %418 = vmatpush1.msra.mxu0 0.0
        %419 = vmatprep.subr.mxu0 0.0
        %420 = vmatpush1.msra.mxu0 0.0
        %421 = vmatprep.subr.mxu0 0.0
        %422 = vmatpush1.msra.mxu0 0.0
        %423 = vmatprep.subr.mxu0 0.0
        %424 = vmatpush1.msra.mxu0 0.0
        %425 = vmatprep.subr.mxu0 0.0
        %426 = vmatpush1.msra.mxu0 0.0
        %427 = vmatprep.subr.mxu0 0.0
        %428 = vmatpush1.msra.mxu0 0.0
        %429 = vmatprep.subr.mxu0 0.0
        %430 = vmatpush1.msra.mxu0 0.0
        %431 = vmatprep.subr.mxu0 0.0
        %432 = vmatpush1.msra.mxu0 0.0
        %433 = vmatprep.subr.mxu0 0.0
        %434 = vmatpush1.msra.mxu0 0.0
        %435 = vmatprep.subr.mxu0 0.0
        %436 = vmatpush1.msra.mxu0 0.0
        %437 = vmatprep.subr.mxu0 0.0
        %438 = vmatpush1.msra.mxu0 0.0
        %439 = vmatprep.subr.mxu0 0.0
        %440 = vmatpush1.msra.mxu0 0.0
        %441 = vmatprep.subr.mxu0 0.0
        %442 = vmatpush1.msra.mxu0 0.0
        %443 = vmatprep.subr.mxu0 0.0
        %444 = vmatpush1.msra.mxu0 0.0
        %445 = vmatprep.subr.mxu0 0.0
        %446 = vmatpush1.msra.mxu0 0.0
        %447 = vmatprep.subr.mxu0 0.0
        %448 = vmatpush1.msra.mxu0 0.0
        %449 = vmatprep.subr.mxu0 0.0
        %450 = vmatpush1.msra.mxu0 0.0
        %451 = vmatprep.subr.mxu0 0.0
        %452 = vmatpush1.msra.mxu0 0.0
        %453 = vmatprep.subr.mxu0 0.0
        %454 = vmatpush1.msra.mxu0 0.0
        %455 = vmatprep.subr.mxu0 0.0
        %456 = vmatpush1.msra.mxu0 0.0
        %457 = vmatprep.subr.mxu0 0.0
        %458 = vmatpush1.msra.mxu0 0.0
        %459 = vmatprep.subr.mxu0 0.0
        %460 = vmatpush1.msra.mxu0 0.0
        %461 = vmatprep.subr.mxu0 0.0
        %462 = vmatpush1.msra.mxu0 0.0
        %463 = vmatprep.subr.mxu0 0.0
        %464 = vmatpush1.msra.mxu0 0.0
        %465 = vmatprep.subr.mxu0 0.0
        %466 = vmatpush1.msra.mxu0 0.0
        %467 = vmatprep.subr.mxu0 0.0
        %468 = vmatpush1.msra.mxu0 0.0
        %469 = vmatprep.subr.mxu0 0.0
        %470 = vmatpush1.msra.mxu0 0.0
        %471 = vmatprep.mubr.f32.mxu0 0.0
        %472 = vmatmul.mubr.f32.gmra.mrb[0].mxu0 %v405
        %v473 = vpop.f32.mrb[0].mxu0
        %v474 = vadd.f32 %v401, %v473
        %v475 = vpop.f32.mrb[0].mxu0
        %476 = vdwg.mxu0
        %s477 = scalar_lea.vmem %s3, 2
        %v478 = vld [vmem:[%s477] sm:$0x3]
        %s479 = scalar_lea.vmem %s4, 2
        %v480 = vld [vmem:[%s479] sm:$0x3]
        %482 = vset.pattern.permute.xlu0 0
        %483 = vperm.xlu0 %482, %v480
        %v484 = vpop.permute.xlu0 %483
        %v487 = vsel %vm403, %v478, 0
        %489 = vmatprep.subr.mxu0 0.0
        %490 = vmatpush1.msra.mxu0 %v392
        %491 = vmatprep.subr.mxu0 0.0
        %492 = vmatpush1.msra.mxu0 %v393
        %493 = vmatprep.subr.mxu0 0.0
        %494 = vmatpush1.msra.mxu0 %v394
        %495 = vmatprep.subr.mxu0 0.0
        %496 = vmatpush1.msra.mxu0 %v395
        %497 = vmatprep.subr.mxu0 0.0
        %498 = vmatpush1.msra.mxu0 0.0
        %499 = vmatprep.subr.mxu0 0.0
        %500 = vmatpush1.msra.mxu0 0.0
        %501 = vmatprep.subr.mxu0 0.0
        %502 = vmatpush1.msra.mxu0 0.0
        %503 = vmatprep.subr.mxu0 0.0
        %504 = vmatpush1.msra.mxu0 0.0
        %505 = vmatprep.subr.mxu0 0.0
        %506 = vmatpush1.msra.mxu0 0.0
        %507 = vmatprep.subr.mxu0 0.0
        %508 = vmatpush1.msra.mxu0 0.0
        %509 = vmatprep.subr.mxu0 0.0
        %510 = vmatpush1.msra.mxu0 0.0
        %511 = vmatprep.subr.mxu0 0.0
        %512 = vmatpush1.msra.mxu0 0.0
        %513 = vmatprep.subr.mxu0 0.0
        %514 = vmatpush1.msra.mxu0 0.0
        %515 = vmatprep.subr.mxu0 0.0
        %516 = vmatpush1.msra.mxu0 0.0
        %517 = vmatprep.subr.mxu0 0.0
        %518 = vmatpush1.msra.mxu0 0.0
        %519 = vmatprep.subr.mxu0 0.0
        %520 = vmatpush1.msra.mxu0 0.0
        %521 = vmatprep.subr.mxu0 0.0
        %522 = vmatpush1.msra.mxu0 0.0
        %523 = vmatprep.subr.mxu0 0.0
        %524 = vmatpush1.msra.mxu0 0.0
        %525 = vmatprep.subr.mxu0 0.0
        %526 = vmatpush1.msra.mxu0 0.0
        %527 = vmatprep.subr.mxu0 0.0
        %528 = vmatpush1.msra.mxu0 0.0
        %529 = vmatprep.subr.mxu0 0.0
        %530 = vmatpush1.msra.mxu0 0.0
        %531 = vmatprep.subr.mxu0 0.0
        %532 = vmatpush1.msra.mxu0 0.0
        %533 = vmatprep.subr.mxu0 0.0
        %534 = vmatpush1.msra.mxu0 0.0
        %535 = vmatprep.subr.mxu0 0.0
        %536 = vmatpush1.msra.mxu0 0.0
        %537 = vmatprep.subr.mxu0 0.0
        %538 = vmatpush1.msra.mxu0 0.0
        %539 = vmatprep.subr.mxu0 0.0
        %540 = vmatpush1.msra.mxu0 0.0
        %541 = vmatprep.subr.mxu0 0.0
        %542 = vmatpush1.msra.mxu0 0.0
        %543 = vmatprep.subr.mxu0 0.0
        %544 = vmatpush1.msra.mxu0 0.0
        %545 = vmatprep.subr.mxu0 0.0
        %546 = vmatpush1.msra.mxu0 0.0
        %547 = vmatprep.subr.mxu0 0.0
        %548 = vmatpush1.msra.mxu0 0.0
        %549 = vmatprep.subr.mxu0 0.0
        %550 = vmatpush1.msra.mxu0 0.0
        %551 = vmatprep.subr.mxu0 0.0
        %552 = vmatpush1.msra.mxu0 0.0
        %553 = vmatprep.mubr.f32.mxu0 0.0
        %554 = vmatmul.mubr.f32.gmra.mrb[0].mxu0 %v487
        %v555 = vpop.f32.mrb[0].mxu0
        %v556 = vadd.f32 %v484, %v555
        %v557 = vpop.f32.mrb[0].mxu0
        %558 = vdwg.mxu0
        %v559 = vand.u32 2147483647, %v474
        %v560 = vsub.f32 0.0, %v559
        %v561 = vmul.f32 %v560, 1.442695
        %v562 = vpow.pop %v561
        %v563 = vadd.f32 %v562, 1.0
        %vm564 = vcmp.ge.f32.partialorder %v474, 0.0
        %v565 = vsel %vm564, 1.0, %v562
        %v566 = vrcp.pop %v563
        %v567 = vmul.f32 %v565, %v566
        %v568 = vadd.f32 %v303, %v556
        %v569 = vmul.f32 %v568, %v567
        %570 = vst [vmem:[%s290] sm:$0x3] %v569
        %v571 = vmin.f32 %v474, 0.0
        %v572 = vlog2.pop %v563
        %v573 = vmul.f32 %v572, 0.6931472
        %v574 = vsub.f32 %v571, %v573
        %vm575 = vcmask 1041408
        %v576 = vsel %vm575, %v574, 0.0
        %v577 = vrot.slane %v576, 4
        %v578 = vadd.f32 %v576, %v577
        %v579 = vrot.slane %v578, 2
        %v580 = vadd.f32 %v578, %v579
        %v581 = vrot.slane %v580, 1
        %v582 = vadd.f32 %v580, %v581
        %v583 = vld [vmem:[%s296] sm:$0x1]
        %v584 = vadd.f32 %v583, %v582
        %585 = vst [vmem:[%s296] sm:$0x1] %v584
        %s586 = sand.u32 %s161, 1
        %s587 = scalar_lea.sflag [#allocation4], %s586
        %s588 = sand.u32 %s161, 1
        %s589 = smul.addr %s588, 2
        %s590 = scalar_lea.vmem [#allocation5], %s589
        %s591 = sand.u32 %s187, 1
        %s592 = scalar_lea.sflag [#allocation7], %s591
        %s593 = sand.u32 %s187, 1
        %s594 = scalar_lea.vmem [#allocation6], %s593
        // Predicated region
        $region49: #{tpu_custom_call.1} parent=39 // pred_check
          %p595 = pneg %p171
        $region50: #{tpu_custom_call.1} parent=39 // pred_check_branch
          %597 = sbr.rel (%p595) target = $region52
        $region51: #{tpu_custom_call.1} parent=39 // pred_region
          %s599 = ssub.s32 32, 32
          %600 = vsyncadd %s587, %s599
          %s601 = sadd.s32 %s32, 2
          %s602 = smul.addr %s31, 4
          %s603 = sadd.s32 %s601, %s602
          %s604 = smul.addr %s603, 32
          %s605 = scalar_lea.hbm %s5, %s604
          %s607 = sshll.u32 %s590, 4
          %s608 = int_to_ptr.vmem [resolvable:$true] %s607
          %610 = dma.vmem_to_hbm [thread:$0]  %s608, 32, %s605, %s587
        $region52: #{tpu_custom_call.1} parent=39 // pred_fallthru
          _
        // Predicated region
        $region53: #{tpu_custom_call.1} parent=39 // pred_check
          %p611 = pneg %p197
        $region54: #{tpu_custom_call.1} parent=39 // pred_check_branch
          %613 = sbr.rel (%p611) target = $region56
        $region55: #{tpu_custom_call.1} parent=39 // pred_region
          %s615 = ssub.s32 16, 16
          %616 = vsyncadd %s592, %s615
          %s617 = smul.addr %s31, 16
          %s618 = scalar_lea.hbm %s6, %s617
          %s620 = sshll.u32 %s594, 4
          %s621 = int_to_ptr.vmem [resolvable:$true] %s620
          %623 = dma.vmem_to_hbm [thread:$0]  %s621, 16, %s618, %s592
        $region56: #{tpu_custom_call.1} parent=39 // pred_fallthru
          _
      $region40: #{tpu_custom_call.1} parent=5 // pred_fallthru
        _
      %p624 = scmp.le.s32.totalorder 2, %s22
      // Predicated region
      $region57: #{tpu_custom_call.1} parent=5 // pred_check
        %p625 = pneg %p624
      $region58: #{tpu_custom_call.1} parent=5 // pred_check_branch
        %627 = sbr.rel (%p625) target = $region60
      $region59: #{tpu_custom_call.1} parent=5 // pred_region
        %s628 = ssub.s32 %s22, 2
        // Predicated region
        $region61: #{tpu_custom_call.1} parent=59 // pred_check
          %p629 = pneg %p177
        $region62: #{tpu_custom_call.1} parent=59 // pred_check_branch
          %631 = sbr.rel (%p629) target = $region64
        $region63: #{tpu_custom_call.1} parent=59 // pred_region
          %s632 = sand.u32 %s162, 1
          %s633 = scalar_lea.sflag [#allocation4], %s632
          %s634 = sand.u32 %s162, 1
          %s635 = smul.addr %s634, 2
          %s636 = scalar_lea.vmem [#allocation5], %s635
          %637 = dma.done %s633, 32
        $region64: #{tpu_custom_call.1} parent=59 // pred_fallthru
          _
        // Predicated region
        $region65: #{tpu_custom_call.1} parent=59 // pred_check
          %p638 = pneg %p203
        $region66: #{tpu_custom_call.1} parent=59 // pred_check_branch
          %640 = sbr.rel (%p638) target = $region68
        $region67: #{tpu_custom_call.1} parent=59 // pred_region
          %s641 = sand.u32 %s188, 1
          %s642 = scalar_lea.sflag [#allocation7], %s641
          %s643 = sand.u32 %s188, 1
          %s644 = scalar_lea.vmem [#allocation6], %s643
          %645 = dma.done %s642, 16
        $region68: #{tpu_custom_call.1} parent=59 // pred_fallthru
          _
      $region60: #{tpu_custom_call.1} parent=5 // pred_fallthru
        _
    $region6: #{tpu_custom_call.1} parent=1 // loop_footer
      %s26 = sadd.s32 1, %s22
    $region7: #{tpu_custom_call.1} parent=1 // loop_footer_branch
      %21 = sbr.rel target = $region3
    $region8: #{tpu_custom_call.1} parent=1 // loop_exit
      _
    %646 = vsyncpa [#allocation3], 1
    %s647 = scalar_lea.sflag [#allocation3], 1
    %648 = vsyncpa %s647, 1
    %649 = vsyncpa [#allocation4], 1
    %s650 = scalar_lea.sflag [#allocation4], 1
    %651 = vsyncpa %s650, 1
    %652 = vsyncpa [#allocation7], 1
    %s653 = scalar_lea.sflag [#allocation7], 1
    %654 = vsyncpa %s653, 1

</llo_original>
